<compile_context>
chip_gen: v6e
topology: v6e:2x2x1
jax: 0.10.0
libtpu: 0.0.40
codegen_flags: <defaults>
</compile_context>

<pallas_src>
import jax
import jax.numpy as jnp
from jax import lax
from jax.experimental import pallas as pl
from jax.experimental.pallas import tpu as pltpu

NEG_SLOPE = 0.1                 # nn.LeakyReLU(0.1)
CYCLE_THR = 10.0 / 640.0        # cycle-consistency mask threshold
HIDDEN = 256                    # fc hidden width (fixed by the module)
HEAD_LANES = 128                # lane-dense fused fc2 output width


def _leaky(x):
    return jnp.where(x >= 0, x, NEG_SLOPE * x)


def _lccnet_head_kernel(planes_ref, w1e_ref, w1o_ref, wbr_ref, w2_ref,
                        bias_ref, head_ref, mask_ref):
    """planes_ref: (6, Bp, Kp) = [qx, qy, cx, cy, cyc_x, cyc_y] (f32).

    w1e/w1o : (Kp, 256) bf16 -- fc1 weight rows acting on x / y diffs
              (PyTorch's interleaved x.view(B,-1) flatten folded into the
               weight-row split, so flat @ W1 == lx @ w1e + ly @ w1o).
    wbr     : (256, 512) bf16 -- [fc1_trasl | fc1_rot] fused.
    w2      : (512, 128) bf16 -- fc2_trasl in rows 0:256 / cols 0:3,
                                  fc2_rot   in rows 256:512 / cols 3:7.
    bias    : (1, 896)  f32   -- [b1 | bt1 | br1 | b2_fused(128)].
    """
    # --- query scaling: query_input[:, :, 0] /= 2 ; query_input[:, :, 1] /= 2
    qxs = planes_ref[0] * 0.5
    qys = planes_ref[1] * 0.5

    # --- diff between (scaled) query and predicted corrs + LeakyReLU
    lx = _leaky(qxs - planes_ref[2])                       # (Bp, Kp)
    ly = _leaky(qys - planes_ref[3])                       # (Bp, Kp)

    b1 = bias_ref[:, 0:HIDDEN]                             # (1, 256)
    bbr = bias_ref[:, HIDDEN:3 * HIDDEN]                   # (1, 512)
    b2 = bias_ref[:, 3 * HIDDEN:3 * HIDDEN + HEAD_LANES]   # (1, 128)

    # --- fc1 (interleave folded into weight-row split); bf16 MXU, f32 acc
    h = (jnp.dot(lx.astype(jnp.bfloat16), w1e_ref[...],
                 preferred_element_type=jnp.float32)
         + jnp.dot(ly.astype(jnp.bfloat16), w1o_ref[...],
                   preferred_element_type=jnp.float32)
         + b1)
    h = _leaky(h)                                          # (Bp, 256)

    # --- fused fc1_trasl | fc1_rot branches
    br = _leaky(jnp.dot(h.astype(jnp.bfloat16), wbr_ref[...],
                        preferred_element_type=jnp.float32) + bbr)  # (Bp, 512)

    # --- fused fc2_trasl | fc2_rot: single lane-dense (Bp, 128) output slab
    out = jnp.dot(br.astype(jnp.bfloat16), w2_ref[...],
                  preferred_element_type=jnp.float32) + b2          # (Bp, 128)

    # F.normalize(rot, dim=1) applied in-slab to lanes 3..6 only (eps=1e-12)
    lane = lax.broadcasted_iota(jnp.int32, out.shape, 1)
    is_rot = (lane >= 3) & (lane < 7)
    sumsq = jnp.sum(jnp.where(is_rot, out * out, 0.0), axis=-1, keepdims=True)
    inv = lax.rsqrt(jnp.maximum(sumsq, 1e-24))             # == 1/max(||rot||,1e-12)
    head_ref[...] = jnp.where(is_rot, out * inv, out)

    # --- cycle-consistency mask: ||(cycle - [0.5, 0]) - query_scaled|| < 10/640
    dx = (planes_ref[4] - 0.5) - qxs
    dy = planes_ref[5] - qys
    mask_ref[...] = ((dx * dx + dy * dy) < (CYCLE_THR * CYCLE_THR)).astype(jnp.int32)


def make_params(key, num_kp, hidden=HIDDEN):
    """Deterministic stand-in for nn.Linear default init (weights stored (in, out))."""
    def lin(k, fan_in, fan_out):
        kw, kb = jax.random.split(k)
        bound = 1.0 / jnp.sqrt(jnp.float32(fan_in))
        w = jax.random.uniform(kw, (fan_in, fan_out), jnp.float32, -bound, bound)
        b = jax.random.uniform(kb, (fan_out,), jnp.float32, -bound, bound)
        return w, b

    k1, k2, k3, k4, k5 = jax.random.split(key, 5)
    w1, b1 = lin(k1, num_kp * 2, hidden)     # fc1
    wt1, bt1 = lin(k2, hidden, hidden)       # fc1_trasl
    wr1, br1 = lin(k3, hidden, hidden)       # fc1_rot
    wt2, bt2 = lin(k4, hidden, 3)            # fc2_trasl
    wr2, br2 = lin(k5, hidden, 4)            # fc2_rot
    return dict(w1=w1, b1=b1, wt1=wt1, bt1=bt1, wr1=wr1, br1=br1,
                wt2=wt2, bt2=bt2, wr2=wr2, br2=br2)


def prepare_params(params, num_kp):
    """One-time weight preparation (NOT in the per-call jitted path).

    * splits fc1 into even/odd (x/y) rows and zero-pads K -> Kp (mult. of 128)
    * fuses fc1_trasl|fc1_rot and fc2_trasl|fc2_rot into lane-dense slabs
    * packs all biases into a single (1, 896) f32 row
    * ships the weight matrices as bfloat16 (MXU inputs only)
    """
    kp_pad = max(128, ((num_kp + 127) // 128) * 128)
    pad_rows = ((0, kp_pad - num_kp), (0, 0))

    w1 = params['w1']                                   # (2K, 256)
    w1e = jnp.pad(w1[0::2], pad_rows).astype(jnp.bfloat16)   # rows on x_diff
    w1o = jnp.pad(w1[1::2], pad_rows).astype(jnp.bfloat16)   # rows on y_diff

    w_br = jnp.concatenate([params['wt1'], params['wr1']],
                           axis=1).astype(jnp.bfloat16)       # (256, 512)

    w2 = jnp.zeros((2 * HIDDEN, HEAD_LANES), jnp.float32)
    w2 = w2.at[:HIDDEN, 0:3].set(params['wt2'])
    w2 = w2.at[HIDDEN:, 3:7].set(params['wr2'])
    w2 = w2.astype(jnp.bfloat16)                              # (512, 128)

    biases = jnp.zeros((1, 3 * HIDDEN + HEAD_LANES), jnp.float32)   # (1, 896)
    biases = biases.at[0, 0:HIDDEN].set(params['b1'])
    biases = biases.at[0, HIDDEN:2 * HIDDEN].set(params['bt1'])
    biases = biases.at[0, 2 * HIDDEN:3 * HIDDEN].set(params['br1'])
    biases = biases.at[0, 3 * HIDDEN:3 * HIDDEN + 3].set(params['bt2'])
    biases = biases.at[0, 3 * HIDDEN + 3:3 * HIDDEN + 7].set(params['br2'])

    return dict(w1e=w1e, w1o=w1o, w_br=w_br, w2=w2, biases=biases)


@jax.jit
def lccnet_head(query_input, corrs_pred, cycle, prepared):
    """Fused Pallas head: returns (transl (B,3), rot (B,4), mask bool (B,K))."""
    B, K, _ = query_input.shape
    kp_pad = prepared['w1e'].shape[0]
    bp = max(8, ((B + 7) // 8) * 8)          # sublane-pad the batch dim

    # Pack the six (B, K) coordinate planes into one (6, Bp, Kp) slab:
    # [qx, qy, cx, cy, cyc_x, cyc_y].  Zero padding is neutral through the
    # LeakyReLU diff and the fc1 contraction; padded mask lanes are sliced off.
    stacked = jnp.concatenate([query_input, corrs_pred, cycle], axis=-1)  # (B,K,6)
    planes = jnp.transpose(stacked, (2, 0, 1))                            # (6,B,K)
    planes = jnp.pad(planes, ((0, 0), (0, bp - B), (0, kp_pad - K)))

    vmem = pl.BlockSpec(memory_space=pltpu.MemorySpace.VMEM)
    # NOTE: for a real inference batch (B >> 8) add a grid over the batch dim
    # with dimension_semantics=("parallel",) so v7x can shard across both TCs.
    head, mask = pl.pallas_call(
        _lccnet_head_kernel,
        out_shape=(
            jax.ShapeDtypeStruct((bp, HEAD_LANES), jnp.float32),
            jax.ShapeDtypeStruct((bp, kp_pad), jnp.int32),
        ),
        in_specs=[vmem] * 6,
        out_specs=(vmem, vmem),
    )(planes, prepared['w1e'], prepared['w1o'], prepared['w_br'],
      prepared['w2'], prepared['biases'])

    transl = head[:B, 0:3]
    rot = head[:B, 3:7]
    return transl, rot, mask[:B, :K].astype(bool)


def lccnet_forward(rgb_input, depth_input, query_input, corr_target,
                   corrs_pred, cycle, prepared):
    """Mirrors LCCNet.forward.

    TODO(synk): MonoDepth2 (resnet50 encoder + depth decoder), the matplotlib
    colormap, the PIL drawing helpers, the side-by-side canvas / tvtf.normalize
    and the COTR correspondence transformer (self.corr) are external
    pretrained networks / host-side image plumbing with no in-script Pallas
    equivalent; their outputs `corrs_pred` and `cycle` are accepted as inputs.
    """
    del rgb_input, depth_input  # only consumed by the external backbones

    # corr_target in-place scaling (never used downstream of the head):
    _ = corr_target.at[:, :, 0].set(corr_target[:, :, 0] / 2 + 0.5) \
                   .at[:, :, 1].set(corr_target[:, :, 1] / 2)

    transl, rot, mask = lccnet_head(query_input, corrs_pred, cycle, prepared)

    # cycle[..., 0] = cycle[..., 0] - 0.5  (returned value)
    cycle_out = cycle.at[..., 0].add(-0.5)
    return transl, rot, corrs_pred, cycle_out, mask


def _reference(query_input, corrs_pred, cycle, params):
    """Pure-JAX reference of the head, matching the PyTorch math.

    Matmul operands are cast to bf16 (f32 accumulation) to mirror the kernel's
    MXU precision; everything else is f32.
    """
    def mm(x, w):
        return jnp.dot(x.astype(jnp.bfloat16), w.astype(jnp.bfloat16),
                       preferred_element_type=jnp.float32)

    q = query_input * 0.5
    x_diff = q[:, :, 0] - corrs_pred[:, :, 0]
    y_diff = q[:, :, 1] - corrs_pred[:, :, 1]
    diff = jnp.stack([x_diff, y_diff], axis=2)                  # (B, K, 2)
    x = jnp.where(diff >= 0, diff, NEG_SLOPE * diff)
    x = x.reshape(x.shape[0], -1)                               # interleaved flatten
    h = mm(x, params['w1']) + params['b1']
    h = jnp.where(h >= 0, h, NEG_SLOPE * h)
    t = mm(h, params['wt1']) + params['bt1']
    t = jnp.where(t >= 0, t, NEG_SLOPE * t)
    r = mm(h, params['wr1']) + params['br1']
    r = jnp.where(r >= 0, r, NEG_SLOPE * r)
    transl = mm(t, params['wt2']) + params['bt2']
    rot = mm(r, params['wr2']) + params['br2']
    rot = rot / jnp.maximum(jnp.linalg.norm(rot, axis=1, keepdims=True), 1e-12)
    cyc = cycle.at[..., 0].add(-0.5)
    mask = jnp.linalg.norm(cyc - q, axis=-1) < CYCLE_THR
    return transl, rot, mask


if __name__ == "__main__":
    key = jax.random.PRNGKey(0)
    kq, kc, kcy, kt, kr, kd, kp = jax.random.split(key, 7)

    B, K = 2, 64  # small shapes: batch=2, num_kp=64 (500 in the original module)
    query_input = jax.random.uniform(kq, (B, K, 2), jnp.float32)
    corrs_pred = jax.random.uniform(kc, (B, K, 2), jnp.float32)      # stand-in for COTR output
    cycle = jax.random.uniform(kcy, (B, K, 2), jnp.float32)          # stand-in for COTR cycle output
    corr_target = jax.random.uniform(kt, (B, K, 2), jnp.float32)
    rgb_input = jax.random.normal(kr, (B, 3, 16, 32), jnp.float32)   # NCHW, feeds external backbone only
    depth_input = jax.random.normal(kd, (B, 1, 16, 32), jnp.float32)

    params = make_params(kp, K)
    prepared = prepare_params(params, K)     # one-time weight prep (bf16, fused, padded)

    transl, rot, corrs_out, cycle_out, mask = lccnet_forward(
        rgb_input, depth_input, query_input, corr_target, corrs_pred, cycle,
        prepared)
    jax.block_until_ready((transl, rot, corrs_out, cycle_out, mask))

    # sanity-check against a pure-JAX reference
    ref_t, ref_r, ref_m = _reference(query_input, corrs_pred, cycle, params)
    assert transl.shape == (B, 3) and rot.shape == (B, 4) and mask.shape == (B, K)
    assert jnp.allclose(transl, ref_t, rtol=1e-3, atol=1e-3)
    assert jnp.allclose(rot, ref_r, rtol=1e-3, atol=1e-3)
    assert bool(jnp.all(mask == ref_m))

    print("KERNEL_OK")
</pallas_src>

<mosaic_0001>
module attributes {stable_mosaic.version = 11 : i64} {
  func.func @_lccnet_head_kernel(%arg0: memref<6x8x128xf32, #tpu.memory_space<vmem>>, %arg1: memref<128x256xbf16, #tpu.memory_space<vmem>>, %arg2: memref<128x256xbf16, #tpu.memory_space<vmem>>, %arg3: memref<256x512xbf16, #tpu.memory_space<vmem>>, %arg4: memref<512x128xbf16, #tpu.memory_space<vmem>>, %arg5: memref<1x896xf32, #tpu.memory_space<vmem>>, %arg6: memref<8x128xf32, #tpu.memory_space<vmem>>, %arg7: memref<8x128xi32, #tpu.memory_space<vmem>>) attributes {dimension_semantics = [], scalar_prefetch = 0 : i64, scratch_operands = 0 : i64, tpu.core_type = #tpu.core_type<tc>} {
    %c0 = arith.constant 0 : index
    %c0_0 = arith.constant 0 : index
    %c0_1 = arith.constant 0 : index
    %0 = vector.load %arg0[%c0, %c0_0, %c0_1] : memref<6x8x128xf32, #tpu.memory_space<vmem>>, vector<1x8x128xf32>
    %1 = vector.shape_cast %0 : vector<1x8x128xf32> to vector<8x128xf32>
    %cst = arith.constant 5.000000e-01 : f32
    %2 = vector.broadcast %cst : f32 to vector<8x128xf32>
    %3 = arith.mulf %1, %2 : vector<8x128xf32>
    %c1 = arith.constant 1 : index
    %c0_2 = arith.constant 0 : index
    %c0_3 = arith.constant 0 : index
    %4 = vector.load %arg0[%c1, %c0_2, %c0_3] : memref<6x8x128xf32, #tpu.memory_space<vmem>>, vector<1x8x128xf32>
    %5 = vector.shape_cast %4 : vector<1x8x128xf32> to vector<8x128xf32>
    %cst_4 = arith.constant 5.000000e-01 : f32
    %6 = vector.broadcast %cst_4 : f32 to vector<8x128xf32>
    %7 = arith.mulf %5, %6 : vector<8x128xf32>
    %c2 = arith.constant 2 : index
    %c0_5 = arith.constant 0 : index
    %c0_6 = arith.constant 0 : index
    %8 = vector.load %arg0[%c2, %c0_5, %c0_6] : memref<6x8x128xf32, #tpu.memory_space<vmem>>, vector<1x8x128xf32>
    %9 = vector.shape_cast %8 : vector<1x8x128xf32> to vector<8x128xf32>
    %10 = arith.subf %3, %9 : vector<8x128xf32>
    %cst_7 = arith.constant 0.000000e+00 : f32
    %11 = vector.broadcast %cst_7 : f32 to vector<8x128xf32>
    %12 = arith.cmpf oge, %10, %11 : vector<8x128xf32>
    %cst_8 = arith.constant 1.000000e-01 : f32
    %13 = vector.broadcast %cst_8 : f32 to vector<8x128xf32>
    %14 = arith.mulf %13, %10 : vector<8x128xf32>
    %15 = arith.select %12, %10, %14 : vector<8x128xi1>, vector<8x128xf32>
    %c3 = arith.constant 3 : index
    %c0_9 = arith.constant 0 : index
    %c0_10 = arith.constant 0 : index
    %16 = vector.load %arg0[%c3, %c0_9, %c0_10] : memref<6x8x128xf32, #tpu.memory_space<vmem>>, vector<1x8x128xf32>
    %17 = vector.shape_cast %16 : vector<1x8x128xf32> to vector<8x128xf32>
    %18 = arith.subf %7, %17 : vector<8x128xf32>
    %cst_11 = arith.constant 0.000000e+00 : f32
    %19 = vector.broadcast %cst_11 : f32 to vector<8x128xf32>
    %20 = arith.cmpf oge, %18, %19 : vector<8x128xf32>
    %cst_12 = arith.constant 1.000000e-01 : f32
    %21 = vector.broadcast %cst_12 : f32 to vector<8x128xf32>
    %22 = arith.mulf %21, %18 : vector<8x128xf32>
    %23 = arith.select %20, %18, %22 : vector<8x128xi1>, vector<8x128xf32>
    %c0_13 = arith.constant 0 : index
    %c0_14 = arith.constant 0 : index
    %24 = vector.load %arg5[%c0_13, %c0_14] : memref<1x896xf32, #tpu.memory_space<vmem>>, vector<1x256xf32>
    %c0_15 = arith.constant 0 : index
    %c256 = arith.constant 256 : index
    %25 = vector.load %arg5[%c0_15, %c256] : memref<1x896xf32, #tpu.memory_space<vmem>>, vector<1x512xf32>
    %c0_16 = arith.constant 0 : index
    %c768 = arith.constant 768 : index
    %26 = vector.load %arg5[%c0_16, %c768] : memref<1x896xf32, #tpu.memory_space<vmem>>, vector<1x128xf32>
    %27 = arith.truncf %15 : vector<8x128xf32> to vector<8x128xbf16>
    %c0_17 = arith.constant 0 : index
    %c0_18 = arith.constant 0 : index
    %28 = vector.load %arg1[%c0_17, %c0_18] : memref<128x256xbf16, #tpu.memory_space<vmem>>, vector<128x256xbf16>
    %cst_19 = arith.constant dense<0.000000e+00> : vector<8x256xf32>
    %29 = tpu.matmul %27, %28, %cst_19 {dimension_numbers = #tpu.dot_dimension_numbers<[1], [0], [0], [1], [0, 0, 1, 1], [], []>} : vector<8x128xbf16>, vector<128x256xbf16>, vector<8x256xf32> -> vector<8x256xf32>
    %30 = arith.truncf %23 : vector<8x128xf32> to vector<8x128xbf16>
    %c0_20 = arith.constant 0 : index
    %c0_21 = arith.constant 0 : index
    %31 = vector.load %arg2[%c0_20, %c0_21] : memref<128x256xbf16, #tpu.memory_space<vmem>>, vector<128x256xbf16>
    %cst_22 = arith.constant dense<0.000000e+00> : vector<8x256xf32>
    %32 = tpu.matmul %30, %31, %cst_22 {dimension_numbers = #tpu.dot_dimension_numbers<[1], [0], [0], [1], [0, 0, 1, 1], [], []>} : vector<8x128xbf16>, vector<128x256xbf16>, vector<8x256xf32> -> vector<8x256xf32>
    %33 = arith.addf %29, %32 : vector<8x256xf32>
    %34 = vector.broadcast %24 : vector<1x256xf32> to vector<8x256xf32>
    %35 = arith.addf %33, %34 : vector<8x256xf32>
    %cst_23 = arith.constant 0.000000e+00 : f32
    %36 = vector.broadcast %cst_23 : f32 to vector<8x256xf32>
    %37 = arith.cmpf oge, %35, %36 : vector<8x256xf32>
    %cst_24 = arith.constant 1.000000e-01 : f32
    %38 = vector.broadcast %cst_24 : f32 to vector<8x256xf32>
    %39 = arith.mulf %38, %35 : vector<8x256xf32>
    %40 = arith.select %37, %35, %39 : vector<8x256xi1>, vector<8x256xf32>
    %41 = arith.truncf %40 : vector<8x256xf32> to vector<8x256xbf16>
    %c0_25 = arith.constant 0 : index
    %c0_26 = arith.constant 0 : index
    %42 = vector.load %arg3[%c0_25, %c0_26] : memref<256x512xbf16, #tpu.memory_space<vmem>>, vector<256x512xbf16>
    %cst_27 = arith.constant dense<0.000000e+00> : vector<8x512xf32>
    %43 = tpu.matmul %41, %42, %cst_27 {dimension_numbers = #tpu.dot_dimension_numbers<[1], [0], [0], [1], [0, 0, 1, 1], [], []>} : vector<8x256xbf16>, vector<256x512xbf16>, vector<8x512xf32> -> vector<8x512xf32>
    %44 = vector.broadcast %25 : vector<1x512xf32> to vector<8x512xf32>
    %45 = arith.addf %43, %44 : vector<8x512xf32>
    %cst_28 = arith.constant 0.000000e+00 : f32
    %46 = vector.broadcast %cst_28 : f32 to vector<8x512xf32>
    %47 = arith.cmpf oge, %45, %46 : vector<8x512xf32>
    %cst_29 = arith.constant 1.000000e-01 : f32
    %48 = vector.broadcast %cst_29 : f32 to vector<8x512xf32>
    %49 = arith.mulf %48, %45 : vector<8x512xf32>
    %50 = arith.select %47, %45, %49 : vector<8x512xi1>, vector<8x512xf32>
    %51 = arith.truncf %50 : vector<8x512xf32> to vector<8x512xbf16>
    %c0_30 = arith.constant 0 : index
    %c0_31 = arith.constant 0 : index
    %52 = vector.load %arg4[%c0_30, %c0_31] : memref<512x128xbf16, #tpu.memory_space<vmem>>, vector<512x128xbf16>
    %cst_32 = arith.constant dense<0.000000e+00> : vector<8x128xf32>
    %53 = tpu.matmul %51, %52, %cst_32 {dimension_numbers = #tpu.dot_dimension_numbers<[1], [0], [0], [1], [0, 0, 1, 1], [], []>} : vector<8x512xbf16>, vector<512x128xbf16>, vector<8x128xf32> -> vector<8x128xf32>
    %54 = vector.broadcast %26 : vector<1x128xf32> to vector<8x128xf32>
    %55 = arith.addf %53, %54 : vector<8x128xf32>
    %56 = tpu.iota {dimensions = array<i32: 1>} : vector<8x128xi32>
    %c3_i32 = arith.constant 3 : i32
    %57 = vector.broadcast %c3_i32 : i32 to vector<8x128xi32>
    %58 = arith.cmpi sge, %56, %57 : vector<8x128xi32>
    %c7_i32 = arith.constant 7 : i32
    %59 = vector.broadcast %c7_i32 : i32 to vector<8x128xi32>
    %60 = arith.cmpi slt, %56, %59 : vector<8x128xi32>
    %61 = arith.andi %58, %60 : vector<8x128xi1>
    %62 = arith.mulf %55, %55 : vector<8x128xf32>
    %cst_33 = arith.constant 0.000000e+00 : f32
    %63 = vector.broadcast %cst_33 : f32 to vector<8x128xf32>
    %64 = arith.select %61, %62, %63 : vector<8x128xi1>, vector<8x128xf32>
    %cst_34 = arith.constant dense<0.000000e+00> : vector<8xf32>
    %65 = vector.multi_reduction <add>, %64, %cst_34 [1] : vector<8x128xf32> to vector<8xf32>
    %66 = vector.shape_cast %65 : vector<8xf32> to vector<8x1xf32>
    %cst_35 = arith.constant 1.000000e-24 : f32
    %67 = vector.broadcast %cst_35 : f32 to vector<8x1xf32>
    %68 = arith.maximumf %66, %67 : vector<8x1xf32>
    %69 = math.rsqrt %68 : vector<8x1xf32>
    %70 = vector.broadcast %69 : vector<8x1xf32> to vector<8x128xf32>
    %71 = arith.mulf %55, %70 : vector<8x128xf32>
    %72 = arith.select %61, %71, %55 : vector<8x128xi1>, vector<8x128xf32>
    %c0_36 = arith.constant 0 : index
    %c0_37 = arith.constant 0 : index
    %73 = vector.load %arg6[%c0_36, %c0_37] : memref<8x128xf32, #tpu.memory_space<vmem>>, vector<8x128xf32>
    tpu.vector_store %arg6[%c0_36, %c0_37], %72 {strides = array<i32>} : memref<8x128xf32, #tpu.memory_space<vmem>>, vector<8x128xf32>,
    %c4 = arith.constant 4 : index
    %c0_38 = arith.constant 0 : index
    %c0_39 = arith.constant 0 : index
    %74 = vector.load %arg0[%c4, %c0_38, %c0_39] : memref<6x8x128xf32, #tpu.memory_space<vmem>>, vector<1x8x128xf32>
    %75 = vector.shape_cast %74 : vector<1x8x128xf32> to vector<8x128xf32>
    %cst_40 = arith.constant 5.000000e-01 : f32
    %76 = vector.broadcast %cst_40 : f32 to vector<8x128xf32>
    %77 = arith.subf %75, %76 : vector<8x128xf32>
    %78 = arith.subf %77, %3 : vector<8x128xf32>
    %c5 = arith.constant 5 : index
    %c0_41 = arith.constant 0 : index
    %c0_42 = arith.constant 0 : index
    %79 = vector.load %arg0[%c5, %c0_41, %c0_42] : memref<6x8x128xf32, #tpu.memory_space<vmem>>, vector<1x8x128xf32>
    %80 = vector.shape_cast %79 : vector<1x8x128xf32> to vector<8x128xf32>
    %81 = arith.subf %80, %7 : vector<8x128xf32>
    %82 = arith.mulf %78, %78 : vector<8x128xf32>
    %83 = arith.mulf %81, %81 : vector<8x128xf32>
    %84 = arith.addf %82, %83 : vector<8x128xf32>
    %cst_43 = arith.constant 2.44140625E-4 : f32
    %85 = vector.broadcast %cst_43 : f32 to vector<8x128xf32>
    %86 = arith.cmpf olt, %84, %85 : vector<8x128xf32>
    %87 = arith.extui %86 : vector<8x128xi1> to vector<8x128xi32>
    %c0_44 = arith.constant 0 : index
    %c0_45 = arith.constant 0 : index
    %88 = vector.load %arg7[%c0_44, %c0_45] : memref<8x128xi32, #tpu.memory_space<vmem>>, vector<8x128xi32>
    tpu.vector_store %arg7[%c0_44, %c0_45], %87 {strides = array<i32>} : memref<8x128xi32, #tpu.memory_space<vmem>>, vector<8x128xi32>,
    return
  }
}

</mosaic_0001>

<llo_original>
// kernel: lccnet_head.1
$region0: #{lccnet_head.1}
  #allocation0 [shape = 'u32[]', space=smem, size = 0x4, offset = 0x4, fixed_abs, tag = 'smem constant byte address 0x4 - core index']
  #allocation1 [shape = 'u32[144,128]{1,0:T(1,128)}', space=vmem, size = 0x12000, scoped, tag = 'internal scratch']
  %s0 = inlined_call_operand.vmem [shape: f32[6,8,128], index: 0, kind: input, shape index: {}]
  %s1 = inlined_call_operand.hbm [shape: bf16[128,256], index: 1, kind: input, shape index: {}]
  %s2 = inlined_call_operand.hbm [shape: bf16[128,256], index: 2, kind: input, shape index: {}]
  %s3 = inlined_call_operand.hbm [shape: bf16[256,512], index: 3, kind: input, shape index: {}]
  %s4 = inlined_call_operand.hbm [shape: bf16[512,128], index: 4, kind: input, shape index: {}]
  %s5 = inlined_call_operand.vmem [shape: f32[1,896], index: 5, kind: input, shape index: {}]
  %s6 = inlined_call_operand.vmem [shape: f32[8,128], index: 6, kind: output, shape index: {0}]
  %s7 = inlined_call_operand.vmem [shape: s32[8,128], index: 7, kind: output, shape index: {1}]
  %8 = xla_tuple %s6, %s7
  %s9 = sld [smem:[#allocation0]]
  $region58: #{lccnet_head.1} parent=0
    _
  %s11 = ssub.s32 1, %s9
  %s12 = scalar_select 0, %s11, %s9
  $region1: #{lccnet_head.1} parent=0
    #allocation2 [shape = 'u8[65536]{0}', space=vmem, size = 0x10000, scoped, tag = 'input window, operand 1, single buffered']
    #allocation3 [shape = 's32[1]{0}', space=sflag, size = 0x4, scoped, tag = 'scoped memory for lccnet_head.1']
    #allocation4 [shape = 'u8[65536]{0}', space=vmem, size = 0x10000, scoped, tag = 'input window, operand 2, single buffered']
    #allocation5 [shape = 's32[1]{0}', space=sflag, size = 0x4, scoped, tag = 'scoped memory for lccnet_head.1']
    #allocation6 [shape = 'u8[262144]{0}', space=vmem, size = 0x40000, scoped, tag = 'input window, operand 3, single buffered']
    #allocation7 [shape = 'u8[131072]{0}', space=vmem, size = 0x20000, scoped, tag = 'input window, operand 4, single buffered']
    #allocation8 [shape = 's32[1]{0}', space=sflag, size = 0x4, scoped, tag = 'scoped memory for lccnet_head.1']
    %13 = vsyncpa [#allocation3], 0
    %14 = vsyncpa [#allocation5], 0
    %15 = vsyncpa [#allocation8], 0
    // Predicated region
    $region2: #{lccnet_head.1} parent=1 // pred_check
      _
    $region3: #{lccnet_head.1} parent=1 // pred_check_branch
      %17 = sbr.rel (0) target = $region5
    $region4: #{lccnet_head.1} parent=1 // pred_region
      _
    $region5: #{lccnet_head.1} parent=1 // pred_fallthru
      _
    // Predicated region
    $region6: #{lccnet_head.1} parent=1 // pred_check
      _
    $region7: #{lccnet_head.1} parent=1 // pred_check_branch
      %19 = sbr.rel (0) target = $region9
    $region8: #{lccnet_head.1} parent=1 // pred_region
      %s21 = ssub.s32 2048, 2048
      %22 = vsyncadd [#allocation3], %s21
      %s23 = sshll.u32 [#allocation2], 4
      %s24 = int_to_ptr.vmem [resolvable:$true] %s23
      %29 = dma.hbm_to_vmem [thread:$0]  %s1, 2048, %s24, [#allocation3], 128, 128, 8
    $region9: #{lccnet_head.1} parent=1 // pred_fallthru
      _
    // Predicated region
    $region10: #{lccnet_head.1} parent=1 // pred_check
      _
    $region11: #{lccnet_head.1} parent=1 // pred_check_branch
      %31 = sbr.rel (0) target = $region13
    $region12: #{lccnet_head.1} parent=1 // pred_region
      %s33 = ssub.s32 2048, 2048
      %34 = vsyncadd [#allocation5], %s33
      %s35 = sshll.u32 [#allocation4], 4
      %s36 = int_to_ptr.vmem [resolvable:$true] %s35
      %41 = dma.hbm_to_vmem [thread:$0]  %s2, 2048, %s36, [#allocation5], 128, 128, 8
    $region13: #{lccnet_head.1} parent=1 // pred_fallthru
      _
    // Predicated region
    $region14: #{lccnet_head.1} parent=1 // pred_check
      _
    $region15: #{lccnet_head.1} parent=1 // pred_check_branch
      %43 = sbr.rel (0) target = $region17
    $region16: #{lccnet_head.1} parent=1 // pred_region
      %s45 = ssub.s32 8192, 8192
      %46 = vsyncadd [#allocation5], %s45
      %s47 = sshll.u32 [#allocation6], 4
      %s48 = int_to_ptr.vmem [resolvable:$true] %s47
      %53 = dma.hbm_to_vmem [thread:$0]  %s3, 8192, %s48, [#allocation5], 256, 256, 16
    $region17: #{lccnet_head.1} parent=1 // pred_fallthru
      _
    // Predicated region
    $region18: #{lccnet_head.1} parent=1 // pred_check
      _
    $region19: #{lccnet_head.1} parent=1 // pred_check_branch
      %55 = sbr.rel (0) target = $region21
    $region20: #{lccnet_head.1} parent=1 // pred_region
      %s57 = ssub.s32 4096, 4096
      %58 = vsyncadd [#allocation8], %s57
      %s59 = sshll.u32 [#allocation7], 4
      %s60 = int_to_ptr.vmem [resolvable:$true] %s59
      %65 = dma.hbm_to_vmem [thread:$0]  %s4, 4096, %s60, [#allocation8], 64, 64, 4
    $region21: #{lccnet_head.1} parent=1 // pred_fallthru
      _
    // Predicated region
    $region22: #{lccnet_head.1} parent=1 // pred_check
      _
    $region23: #{lccnet_head.1} parent=1 // pred_check_branch
      %67 = sbr.rel (0) target = $region25
    $region24: #{lccnet_head.1} parent=1 // pred_region
      _
    $region25: #{lccnet_head.1} parent=1 // pred_fallthru
      _
    // Predicated region
    $region26: #{lccnet_head.1} parent=1 // pred_check
      _
    $region27: #{lccnet_head.1} parent=1 // pred_check_branch
      %69 = sbr.rel (0) target = $region29
    $region28: #{lccnet_head.1} parent=1 // pred_region
      %70 = dma.done [#allocation3], 2048
    $region29: #{lccnet_head.1} parent=1 // pred_fallthru
      _
    // Predicated region
    $region30: #{lccnet_head.1} parent=1 // pred_check
      _
    $region31: #{lccnet_head.1} parent=1 // pred_check_branch
      %72 = sbr.rel (0) target = $region33
    $region32: #{lccnet_head.1} parent=1 // pred_region
      %73 = dma.done [#allocation5], 2048
    $region33: #{lccnet_head.1} parent=1 // pred_fallthru
      _
    // Predicated region
    $region34: #{lccnet_head.1} parent=1 // pred_check
      _
    $region35: #{lccnet_head.1} parent=1 // pred_check_branch
      %75 = sbr.rel (0) target = $region37
    $region36: #{lccnet_head.1} parent=1 // pred_region
      %76 = dma.done [#allocation5], 8192
    $region37: #{lccnet_head.1} parent=1 // pred_fallthru
      _
    // Predicated region
    $region38: #{lccnet_head.1} parent=1 // pred_check
      _
    $region39: #{lccnet_head.1} parent=1 // pred_check_branch
      %78 = sbr.rel (0) target = $region41
    $region40: #{lccnet_head.1} parent=1 // pred_region
      %79 = dma.done [#allocation8], 4096
    $region41: #{lccnet_head.1} parent=1 // pred_fallthru
      _
    %v81 = vld [vmem:[%s0] sm:$0xff]
    %v82 = vmul.f32 %v81, 0.5
    %s83 = scalar_lea.vmem %s0, 8
    %v84 = vld [vmem:[%s83] sm:$0xff]
    %v85 = vmul.f32 %v84, 0.5
    %s86 = scalar_lea.vmem %s0, 16
    %v87 = vld [vmem:[%s86] sm:$0xff]
    %v88 = vsub.f32 %v82, %v87
    %vm89 = vcmp.ge.f32.partialorder %v88, 0.0
    %v90 = vmul.f32 %v88, 0.1
    %v91 = vsel %vm89, %v88, %v90
    %s92 = scalar_lea.vmem %s0, 24
    %v93 = vld [vmem:[%s92] sm:$0xff]
    %v94 = vsub.f32 %v85, %v93
    %vm95 = vcmp.ge.f32.partialorder %v94, 0.0
    %v96 = vmul.f32 %v94, 0.1
    %v97 = vsel %vm95, %v94, %v96
    %v98 = vld [vmem:[%s5] sm:$0x3]
    %v99 = vld [vmem:[%s5 + $0x2] sm:$0xf]
    %v100 = vld [vmem:[%s5 + $0x6] sm:$0x1]
    %v101 = vpack.c.bf16 %v91, %v91
    %v102 = vld [vmem:[#allocation2] sm:$0xff]
    %v103 = vld [vmem:[#allocation2 + $0x8] sm:$0xff]
    %v104 = vld [vmem:[#allocation2 + $0x10] sm:$0xff]
    %v105 = vld [vmem:[#allocation2 + $0x18] sm:$0xff]
    %v106 = vld [vmem:[#allocation2 + $0x20] sm:$0xff]
    %v107 = vld [vmem:[#allocation2 + $0x28] sm:$0xff]
    %v108 = vld [vmem:[#allocation2 + $0x30] sm:$0xff]
    %v109 = vld [vmem:[#allocation2 + $0x38] sm:$0xff]
    %v110 = vld [vmem:[#allocation2 + $0x40] sm:$0xff]
    %v111 = vld [vmem:[#allocation2 + $0x48] sm:$0xff]
    %v112 = vld [vmem:[#allocation2 + $0x50] sm:$0xff]
    %v113 = vld [vmem:[#allocation2 + $0x58] sm:$0xff]
    %v114 = vld [vmem:[#allocation2 + $0x60] sm:$0xff]
    %v115 = vld [vmem:[#allocation2 + $0x68] sm:$0xff]
    %v116 = vld [vmem:[#allocation2 + $0x70] sm:$0xff]
    %v117 = vld [vmem:[#allocation2 + $0x78] sm:$0xff]
    %v118 = vpack.c.bf16 %v97, %v97
    %v119 = vld [vmem:[#allocation4] sm:$0xff]
    %v120 = vld [vmem:[#allocation4 + $0x8] sm:$0xff]
    %v121 = vld [vmem:[#allocation4 + $0x10] sm:$0xff]
    %v122 = vld [vmem:[#allocation4 + $0x18] sm:$0xff]
    %v123 = vld [vmem:[#allocation4 + $0x20] sm:$0xff]
    %v124 = vld [vmem:[#allocation4 + $0x28] sm:$0xff]
    %v125 = vld [vmem:[#allocation4 + $0x30] sm:$0xff]
    %v126 = vld [vmem:[#allocation4 + $0x38] sm:$0xff]
    %v127 = vld [vmem:[#allocation4 + $0x40] sm:$0xff]
    %v128 = vld [vmem:[#allocation4 + $0x48] sm:$0xff]
    %v129 = vld [vmem:[#allocation4 + $0x50] sm:$0xff]
    %v130 = vld [vmem:[#allocation4 + $0x58] sm:$0xff]
    %v131 = vld [vmem:[#allocation4 + $0x60] sm:$0xff]
    %v132 = vld [vmem:[#allocation4 + $0x68] sm:$0xff]
    %v133 = vld [vmem:[#allocation4 + $0x70] sm:$0xff]
    %v134 = vld [vmem:[#allocation4 + $0x78] sm:$0xff]
    %v151 = vunpack.c.l.b16 %v119
    %v152 = vunpack.c.h.b16 %v119
    %v153 = vunpack.c.l.b16 %v120
    %v154 = vunpack.c.h.b16 %v120
    %v155 = vunpack.c.l.b16 %v121
    %v156 = vunpack.c.h.b16 %v121
    %v157 = vunpack.c.l.b16 %v122
    %v158 = vunpack.c.h.b16 %v122
    %v159 = vunpack.c.l.b16 %v123
    %v160 = vunpack.c.h.b16 %v123
    %v161 = vunpack.c.l.b16 %v124
    %v162 = vunpack.c.h.b16 %v124
    %v163 = vunpack.c.l.b16 %v125
    %v164 = vunpack.c.h.b16 %v125
    %v165 = vunpack.c.l.b16 %v126
    %v166 = vunpack.c.h.b16 %v126
    %v167 = vunpack.c.l.b16 %v127
    %v168 = vunpack.c.h.b16 %v127
    %v169 = vunpack.c.l.b16 %v128
    %v170 = vunpack.c.h.b16 %v128
    %v171 = vunpack.c.l.b16 %v129
    %v172 = vunpack.c.h.b16 %v129
    %v173 = vunpack.c.l.b16 %v130
    %v174 = vunpack.c.h.b16 %v130
    %v175 = vunpack.c.l.b16 %v131
    %v176 = vunpack.c.h.b16 %v131
    %v177 = vunpack.c.l.b16 %v132
    %v178 = vunpack.c.h.b16 %v132
    %v179 = vunpack.c.l.b16 %v133
    %v180 = vunpack.c.h.b16 %v133
    %v181 = vunpack.c.l.b16 %v134
    %v182 = vunpack.c.h.b16 %v134
    %v183 = vpack.c.b16 %v153, %v151
    %v184 = vpack.c.b16 %v154, %v152
    %v185 = vpack.c.b16 %v157, %v155
    %v186 = vpack.c.b16 %v158, %v156
    %v187 = vpack.c.b16 %v161, %v159
    %v188 = vpack.c.b16 %v162, %v160
    %v189 = vpack.c.b16 %v165, %v163
    %v190 = vpack.c.b16 %v166, %v164
    %v191 = vpack.c.b16 %v169, %v167
    %v192 = vpack.c.b16 %v170, %v168
    %v193 = vpack.c.b16 %v173, %v171
    %v194 = vpack.c.b16 %v174, %v172
    %v195 = vpack.c.b16 %v177, %v175
    %v196 = vpack.c.b16 %v178, %v176
    %v197 = vpack.c.b16 %v181, %v179
    %v198 = vpack.c.b16 %v182, %v180
    %215 = vmatprep.subr.bf16.mxu0 %v198
    %216 = vmatpush1.bf16.msra.mxu0 %v197
    %217 = vmatprep.subr.bf16.mxu0 %v196
    %218 = vmatpush1.bf16.msra.mxu0 %v195
    %219 = vmatprep.subr.bf16.mxu0 %v194
    %220 = vmatpush1.bf16.msra.mxu0 %v193
    %221 = vmatprep.subr.bf16.mxu0 %v192
    %222 = vmatpush1.bf16.msra.mxu0 %v191
    %223 = vmatprep.subr.bf16.mxu0 %v190
    %224 = vmatpush1.bf16.msra.mxu0 %v189
    %225 = vmatprep.subr.bf16.mxu0 %v188
    %226 = vmatpush1.bf16.msra.mxu0 %v187
    %227 = vmatprep.subr.bf16.mxu0 %v186
    %228 = vmatpush1.bf16.msra.mxu0 %v185
    %229 = vmatprep.subr.bf16.mxu0 %v184
    %230 = vmatpush1.bf16.msra.mxu0 %v183
    %231 = vmatprep.subr.bf16.mxu0 0
    %232 = vmatpush2.bf16.msra.mxu0 0
    %233 = vmatprep.subr.bf16.mxu0 0
    %234 = vmatpush2.bf16.msra.mxu0 0
    %235 = vmatprep.subr.bf16.mxu0 0
    %236 = vmatpush2.bf16.msra.mxu0 0
    %237 = vmatprep.subr.bf16.mxu0 0
    %238 = vmatpush2.bf16.msra.mxu0 0
    %239 = vmatprep.subr.bf16.mxu0 0
    %240 = vmatpush2.bf16.msra.mxu0 0
    %241 = vmatprep.subr.bf16.mxu0 0
    %242 = vmatpush2.bf16.msra.mxu0 0
    %243 = vmatprep.subr.bf16.mxu0 0
    %244 = vmatpush2.bf16.msra.mxu0 0
    %245 = vmatprep.subr.bf16.mxu0 0
    %246 = vmatpush2.bf16.msra.mxu0 0
    %247 = vmatprep.mubr.bf16.mxu0 0
    %248 = vmatmul.mubr.bf16.gmra.mxu0 %v118
    %v249 = vpop.f32.mrf.mxu0
    %v250 = vadd.f32 0.0, %v249
    %v251 = vpop.f32.mrf.mxu0
    %v252 = vadd.f32 0.0, %v251
    %v253 = vpop.f32.mrf.mxu0
    %v254 = vpop.f32.mrf.mxu0
    %255 = vdwg.mxu0
    %v272 = vunpack.c.l.b16 %v102
    %v273 = vunpack.c.h.b16 %v102
    %v274 = vunpack.c.l.b16 %v103
    %v275 = vunpack.c.h.b16 %v103
    %v276 = vunpack.c.l.b16 %v104
    %v277 = vunpack.c.h.b16 %v104
    %v278 = vunpack.c.l.b16 %v105
    %v279 = vunpack.c.h.b16 %v105
    %v280 = vunpack.c.l.b16 %v106
    %v281 = vunpack.c.h.b16 %v106
    %v282 = vunpack.c.l.b16 %v107
    %v283 = vunpack.c.h.b16 %v107
    %v284 = vunpack.c.l.b16 %v108
    %v285 = vunpack.c.h.b16 %v108
    %v286 = vunpack.c.l.b16 %v109
    %v287 = vunpack.c.h.b16 %v109
    %v288 = vunpack.c.l.b16 %v110
    %v289 = vunpack.c.h.b16 %v110
    %v290 = vunpack.c.l.b16 %v111
    %v291 = vunpack.c.h.b16 %v111
    %v292 = vunpack.c.l.b16 %v112
    %v293 = vunpack.c.h.b16 %v112
    %v294 = vunpack.c.l.b16 %v113
    %v295 = vunpack.c.h.b16 %v113
    %v296 = vunpack.c.l.b16 %v114
    %v297 = vunpack.c.h.b16 %v114
    %v298 = vunpack.c.l.b16 %v115
    %v299 = vunpack.c.h.b16 %v115
    %v300 = vunpack.c.l.b16 %v116
    %v301 = vunpack.c.h.b16 %v116
    %v302 = vunpack.c.l.b16 %v117
    %v303 = vunpack.c.h.b16 %v117
    %v304 = vpack.c.b16 %v274, %v272
    %v305 = vpack.c.b16 %v275, %v273
    %v306 = vpack.c.b16 %v278, %v276
    %v307 = vpack.c.b16 %v279, %v277
    %v308 = vpack.c.b16 %v282, %v280
    %v309 = vpack.c.b16 %v283, %v281
    %v310 = vpack.c.b16 %v286, %v284
    %v311 = vpack.c.b16 %v287, %v285
    %v312 = vpack.c.b16 %v290, %v288
    %v313 = vpack.c.b16 %v291, %v289
    %v314 = vpack.c.b16 %v294, %v292
    %v315 = vpack.c.b16 %v295, %v293
    %v316 = vpack.c.b16 %v298, %v296
    %v317 = vpack.c.b16 %v299, %v297
    %v318 = vpack.c.b16 %v302, %v300
    %v319 = vpack.c.b16 %v303, %v301
    %336 = vmatprep.subr.bf16.mxu0 %v319
    %337 = vmatpush1.bf16.msra.mxu0 %v318
    %338 = vmatprep.subr.bf16.mxu0 %v317
    %339 = vmatpush1.bf16.msra.mxu0 %v316
    %340 = vmatprep.subr.bf16.mxu0 %v315
    %341 = vmatpush1.bf16.msra.mxu0 %v314
    %342 = vmatprep.subr.bf16.mxu0 %v313
    %343 = vmatpush1.bf16.msra.mxu0 %v312
    %344 = vmatprep.subr.bf16.mxu0 %v311
    %345 = vmatpush1.bf16.msra.mxu0 %v310
    %346 = vmatprep.subr.bf16.mxu0 %v309
    %347 = vmatpush1.bf16.msra.mxu0 %v308
    %348 = vmatprep.subr.bf16.mxu0 %v307
    %349 = vmatpush1.bf16.msra.mxu0 %v306
    %350 = vmatprep.subr.bf16.mxu0 %v305
    %351 = vmatpush1.bf16.msra.mxu0 %v304
    %352 = vmatprep.subr.bf16.mxu0 0
    %353 = vmatpush2.bf16.msra.mxu0 0
    %354 = vmatprep.subr.bf16.mxu0 0
    %355 = vmatpush2.bf16.msra.mxu0 0
    %356 = vmatprep.subr.bf16.mxu0 0
    %357 = vmatpush2.bf16.msra.mxu0 0
    %358 = vmatprep.subr.bf16.mxu0 0
    %359 = vmatpush2.bf16.msra.mxu0 0
    %360 = vmatprep.subr.bf16.mxu0 0
    %361 = vmatpush2.bf16.msra.mxu0 0
    %362 = vmatprep.subr.bf16.mxu0 0
    %363 = vmatpush2.bf16.msra.mxu0 0
    %364 = vmatprep.subr.bf16.mxu0 0
    %365 = vmatpush2.bf16.msra.mxu0 0
    %366 = vmatprep.subr.bf16.mxu0 0
    %367 = vmatpush2.bf16.msra.mxu0 0
    %368 = vmatprep.mubr.bf16.mxu0 0
    %369 = vmatmul.mubr.bf16.gmra.mxu0 %v101
    %v370 = vpop.f32.mrf.mxu0
    %v371 = vadd.f32 %v250, %v370
    %v372 = vpop.f32.mrf.mxu0
    %v373 = vadd.f32 %v252, %v372
    %v374 = vpop.f32.mrf.mxu0
    %v375 = vpop.f32.mrf.mxu0
    %376 = vdwg.mxu0
    %v378 = vlaneseq
    %v379 = vshrl.u32 %v378, 7
    %v380 = vsub.s32 0, %v379
    %v381 = vrot.slane %v98, %v380
    %v382 = vlaneseq
    %v383 = vshrl.u32 %v382, 7
    %v384 = vsub.s32 1, %v383
    %v385 = vrot.slane %v98, %v384
    %v388 = vadd.f32 %v371, %v381
    %v389 = vadd.f32 %v373, %v385
    %vm390 = vcmp.ge.f32.partialorder %v388, 0.0
    %vm391 = vcmp.ge.f32.partialorder %v389, 0.0
    %v392 = vmul.f32 %v388, 0.1
    %v393 = vmul.f32 %v389, 0.1
    %v394 = vsel %vm390, %v388, %v392
    %v395 = vsel %vm391, %v389, %v393
    %v396 = vpack.c.bf16 %v394, %v394
    %v397 = vpack.c.bf16 %v395, %v395
    %v398 = vld [vmem:[#allocation6] sm:$0xff]
    %v399 = vld [vmem:[#allocation6 + $0x8] sm:$0xff]
    %v400 = vld [vmem:[#allocation6 + $0x10] sm:$0xff]
    %v401 = vld [vmem:[#allocation6 + $0x18] sm:$0xff]
    %v402 = vld [vmem:[#allocation6 + $0x20] sm:$0xff]
    %v403 = vld [vmem:[#allocation6 + $0x28] sm:$0xff]
    %v404 = vld [vmem:[#allocation6 + $0x30] sm:$0xff]
    %v405 = vld [vmem:[#allocation6 + $0x38] sm:$0xff]
    %v406 = vld [vmem:[#allocation6 + $0x40] sm:$0xff]
    %v407 = vld [vmem:[#allocation6 + $0x48] sm:$0xff]
    %v408 = vld [vmem:[#allocation6 + $0x50] sm:$0xff]
    %v409 = vld [vmem:[#allocation6 + $0x58] sm:$0xff]
    %v410 = vld [vmem:[#allocation6 + $0x60] sm:$0xff]
    %v411 = vld [vmem:[#allocation6 + $0x68] sm:$0xff]
    %v412 = vld [vmem:[#allocation6 + $0x70] sm:$0xff]
    %v413 = vld [vmem:[#allocation6 + $0x78] sm:$0xff]
    %v414 = vld [vmem:[#allocation6 + $0x80] sm:$0xff]
    %v415 = vld [vmem:[#allocation6 + $0x88] sm:$0xff]
    %v416 = vld [vmem:[#allocation6 + $0x90] sm:$0xff]
    %v417 = vld [vmem:[#allocation6 + $0x98] sm:$0xff]
    %v418 = vld [vmem:[#allocation6 + $0xa0] sm:$0xff]
    %v419 = vld [vmem:[#allocation6 + $0xa8] sm:$0xff]
    %v420 = vld [vmem:[#allocation6 + $0xb0] sm:$0xff]
    %v421 = vld [vmem:[#allocation6 + $0xb8] sm:$0xff]
    %v422 = vld [vmem:[#allocation6 + $0xc0] sm:$0xff]
    %v423 = vld [vmem:[#allocation6 + $0xc8] sm:$0xff]
    %v424 = vld [vmem:[#allocation6 + $0xd0] sm:$0xff]
    %v425 = vld [vmem:[#allocation6 + $0xd8] sm:$0xff]
    %v426 = vld [vmem:[#allocation6 + $0xe0] sm:$0xff]
    %v427 = vld [vmem:[#allocation6 + $0xe8] sm:$0xff]
    %v428 = vld [vmem:[#allocation6 + $0xf0] sm:$0xff]
    %v429 = vld [vmem:[#allocation6 + $0xf8] sm:$0xff]
    %v430 = vld [vmem:[#allocation6 + $0x100] sm:$0xff]
    %v431 = vld [vmem:[#allocation6 + $0x108] sm:$0xff]
    %v432 = vld [vmem:[#allocation6 + $0x110] sm:$0xff]
    %v433 = vld [vmem:[#allocation6 + $0x118] sm:$0xff]
    %v434 = vld [vmem:[#allocation6 + $0x120] sm:$0xff]
    %v435 = vld [vmem:[#allocation6 + $0x128] sm:$0xff]
    %v436 = vld [vmem:[#allocation6 + $0x130] sm:$0xff]
    %v437 = vld [vmem:[#allocation6 + $0x138] sm:$0xff]
    %v438 = vld [vmem:[#allocation6 + $0x140] sm:$0xff]
    %v439 = vld [vmem:[#allocation6 + $0x148] sm:$0xff]
    %v440 = vld [vmem:[#allocation6 + $0x150] sm:$0xff]
    %v441 = vld [vmem:[#allocation6 + $0x158] sm:$0xff]
    %v442 = vld [vmem:[#allocation6 + $0x160] sm:$0xff]
    %v443 = vld [vmem:[#allocation6 + $0x168] sm:$0xff]
    %v444 = vld [vmem:[#allocation6 + $0x170] sm:$0xff]
    %v445 = vld [vmem:[#allocation6 + $0x178] sm:$0xff]
    %v446 = vld [vmem:[#allocation6 + $0x180] sm:$0xff]
    %v447 = vld [vmem:[#allocation6 + $0x188] sm:$0xff]
    %v448 = vld [vmem:[#allocation6 + $0x190] sm:$0xff]
    %v449 = vld [vmem:[#allocation6 + $0x198] sm:$0xff]
    %v450 = vld [vmem:[#allocation6 + $0x1a0] sm:$0xff]
    %v451 = vld [vmem:[#allocation6 + $0x1a8] sm:$0xff]
    %v452 = vld [vmem:[#allocation6 + $0x1b0] sm:$0xff]
    %v453 = vld [vmem:[#allocation6 + $0x1b8] sm:$0xff]
    %v454 = vld [vmem:[#allocation6 + $0x1c0] sm:$0xff]
    %v455 = vld [vmem:[#allocation6 + $0x1c8] sm:$0xff]
    %v456 = vld [vmem:[#allocation6 + $0x1d0] sm:$0xff]
    %v457 = vld [vmem:[#allocation6 + $0x1d8] sm:$0xff]
    %v458 = vld [vmem:[#allocation6 + $0x1e0] sm:$0xff]
    %v459 = vld [vmem:[#allocation6 + $0x1e8] sm:$0xff]
    %v460 = vld [vmem:[#allocation6 + $0x1f0] sm:$0xff]
    %v461 = vld [vmem:[#allocation6 + $0x1f8] sm:$0xff]
    %v463 = vlaneseq
    %v464 = vshrl.u32 %v463, 7
    %v465 = vsub.s32 0, %v464
    %v466 = vrot.slane %v99, %v465
    %v467 = vlaneseq
    %v468 = vshrl.u32 %v467, 7
    %v469 = vsub.s32 1, %v468
    %v470 = vrot.slane %v99, %v469
    %v471 = vlaneseq
    %v472 = vshrl.u32 %v471, 7
    %v473 = vsub.s32 2, %v472
    %v474 = vrot.slane %v99, %v473
    %v475 = vlaneseq
    %v476 = vshrl.u32 %v475, 7
    %v477 = vsub.s32 3, %v476
    %v478 = vrot.slane %v99, %v477
    %v547 = vunpack.c.l.b16 %v398
    %v548 = vunpack.c.h.b16 %v398
    %v549 = vunpack.c.l.b16 %v399
    %v550 = vunpack.c.h.b16 %v399
    %v551 = vunpack.c.l.b16 %v400
    %v552 = vunpack.c.h.b16 %v400
    %v553 = vunpack.c.l.b16 %v401
    %v554 = vunpack.c.h.b16 %v401
    %v555 = vunpack.c.l.b16 %v402
    %v556 = vunpack.c.h.b16 %v402
    %v557 = vunpack.c.l.b16 %v403
    %v558 = vunpack.c.h.b16 %v403
    %v559 = vunpack.c.l.b16 %v404
    %v560 = vunpack.c.h.b16 %v404
    %v561 = vunpack.c.l.b16 %v405
    %v562 = vunpack.c.h.b16 %v405
    %v563 = vunpack.c.l.b16 %v406
    %v564 = vunpack.c.h.b16 %v406
    %v565 = vunpack.c.l.b16 %v407
    %v566 = vunpack.c.h.b16 %v407
    %v567 = vunpack.c.l.b16 %v408
    %v568 = vunpack.c.h.b16 %v408
    %v569 = vunpack.c.l.b16 %v409
    %v570 = vunpack.c.h.b16 %v409
    %v571 = vunpack.c.l.b16 %v410
    %v572 = vunpack.c.h.b16 %v410
    %v573 = vunpack.c.l.b16 %v411
    %v574 = vunpack.c.h.b16 %v411
    %v575 = vunpack.c.l.b16 %v412
    %v576 = vunpack.c.h.b16 %v412
    %v577 = vunpack.c.l.b16 %v413
    %v578 = vunpack.c.h.b16 %v413
    %v579 = vunpack.c.l.b16 %v414
    %v580 = vunpack.c.h.b16 %v414
    %v581 = vunpack.c.l.b16 %v415
    %v582 = vunpack.c.h.b16 %v415
    %v583 = vunpack.c.l.b16 %v416
    %v584 = vunpack.c.h.b16 %v416
    %v585 = vunpack.c.l.b16 %v417
    %v586 = vunpack.c.h.b16 %v417
    %v587 = vunpack.c.l.b16 %v418
    %v588 = vunpack.c.h.b16 %v418
    %v589 = vunpack.c.l.b16 %v419
    %v590 = vunpack.c.h.b16 %v419
    %v591 = vunpack.c.l.b16 %v420
    %v592 = vunpack.c.h.b16 %v420
    %v593 = vunpack.c.l.b16 %v421
    %v594 = vunpack.c.h.b16 %v421
    %v595 = vunpack.c.l.b16 %v422
    %v596 = vunpack.c.h.b16 %v422
    %v597 = vunpack.c.l.b16 %v423
    %v598 = vunpack.c.h.b16 %v423
    %v599 = vunpack.c.l.b16 %v424
    %v600 = vunpack.c.h.b16 %v424
    %v601 = vunpack.c.l.b16 %v425
    %v602 = vunpack.c.h.b16 %v425
    %v603 = vunpack.c.l.b16 %v426
    %v604 = vunpack.c.h.b16 %v426
    %v605 = vunpack.c.l.b16 %v427
    %v606 = vunpack.c.h.b16 %v427
    %v607 = vunpack.c.l.b16 %v428
    %v608 = vunpack.c.h.b16 %v428
    %v609 = vunpack.c.l.b16 %v429
    %v610 = vunpack.c.h.b16 %v429
    %v611 = vunpack.c.l.b16 %v430
    %v612 = vunpack.c.h.b16 %v430
    %v613 = vunpack.c.l.b16 %v431
    %v614 = vunpack.c.h.b16 %v431
    %v615 = vunpack.c.l.b16 %v432
    %v616 = vunpack.c.h.b16 %v432
    %v617 = vunpack.c.l.b16 %v433
    %v618 = vunpack.c.h.b16 %v433
    %v619 = vunpack.c.l.b16 %v434
    %v620 = vunpack.c.h.b16 %v434
    %v621 = vunpack.c.l.b16 %v435
    %v622 = vunpack.c.h.b16 %v435
    %v623 = vunpack.c.l.b16 %v436
    %v624 = vunpack.c.h.b16 %v436
    %v625 = vunpack.c.l.b16 %v437
    %v626 = vunpack.c.h.b16 %v437
    %v627 = vunpack.c.l.b16 %v438
    %v628 = vunpack.c.h.b16 %v438
    %v629 = vunpack.c.l.b16 %v439
    %v630 = vunpack.c.h.b16 %v439
    %v631 = vunpack.c.l.b16 %v440
    %v632 = vunpack.c.h.b16 %v440
    %v633 = vunpack.c.l.b16 %v441
    %v634 = vunpack.c.h.b16 %v441
    %v635 = vunpack.c.l.b16 %v442
    %v636 = vunpack.c.h.b16 %v442
    %v637 = vunpack.c.l.b16 %v443
    %v638 = vunpack.c.h.b16 %v443
    %v639 = vunpack.c.l.b16 %v444
    %v640 = vunpack.c.h.b16 %v444
    %v641 = vunpack.c.l.b16 %v445
    %v642 = vunpack.c.h.b16 %v445
    %v643 = vunpack.c.l.b16 %v446
    %v644 = vunpack.c.h.b16 %v446
    %v645 = vunpack.c.l.b16 %v447
    %v646 = vunpack.c.h.b16 %v447
    %v647 = vunpack.c.l.b16 %v448
    %v648 = vunpack.c.h.b16 %v448
    %v649 = vunpack.c.l.b16 %v449
    %v650 = vunpack.c.h.b16 %v449
    %v651 = vunpack.c.l.b16 %v450
    %v652 = vunpack.c.h.b16 %v450
    %v653 = vunpack.c.l.b16 %v451
    %v654 = vunpack.c.h.b16 %v451
    %v655 = vunpack.c.l.b16 %v452
    %v656 = vunpack.c.h.b16 %v452
    %v657 = vunpack.c.l.b16 %v453
    %v658 = vunpack.c.h.b16 %v453
    %v659 = vunpack.c.l.b16 %v454
    %v660 = vunpack.c.h.b16 %v454
    %v661 = vunpack.c.l.b16 %v455
    %v662 = vunpack.c.h.b16 %v455
    %v663 = vunpack.c.l.b16 %v456
    %v664 = vunpack.c.h.b16 %v456
    %v665 = vunpack.c.l.b16 %v457
    %v666 = vunpack.c.h.b16 %v457
    %v667 = vunpack.c.l.b16 %v458
    %v668 = vunpack.c.h.b16 %v458
    %v669 = vunpack.c.l.b16 %v459
    %v670 = vunpack.c.h.b16 %v459
    %v671 = vunpack.c.l.b16 %v460
    %v672 = vunpack.c.h.b16 %v460
    %v673 = vunpack.c.l.b16 %v461
    %v674 = vunpack.c.h.b16 %v461
    %v675 = vpack.c.b16 %v551, %v547
    %v676 = vpack.c.b16 %v552, %v548
    %v677 = vpack.c.b16 %v553, %v549
    %v678 = vpack.c.b16 %v554, %v550
    %v679 = vpack.c.b16 %v559, %v555
    %v680 = vpack.c.b16 %v560, %v556
    %v681 = vpack.c.b16 %v561, %v557
    %v682 = vpack.c.b16 %v562, %v558
    %v683 = vpack.c.b16 %v567, %v563
    %v684 = vpack.c.b16 %v568, %v564
    %v685 = vpack.c.b16 %v569, %v565
    %v686 = vpack.c.b16 %v570, %v566
    %v687 = vpack.c.b16 %v575, %v571
    %v688 = vpack.c.b16 %v576, %v572
    %v689 = vpack.c.b16 %v577, %v573
    %v690 = vpack.c.b16 %v578, %v574
    %v691 = vpack.c.b16 %v583, %v579
    %v692 = vpack.c.b16 %v584, %v580
    %v693 = vpack.c.b16 %v585, %v581
    %v694 = vpack.c.b16 %v586, %v582
    %v695 = vpack.c.b16 %v591, %v587
    %v696 = vpack.c.b16 %v592, %v588
    %v697 = vpack.c.b16 %v593, %v589
    %v698 = vpack.c.b16 %v594, %v590
    %v699 = vpack.c.b16 %v599, %v595
    %v700 = vpack.c.b16 %v600, %v596
    %v701 = vpack.c.b16 %v601, %v597
    %v702 = vpack.c.b16 %v602, %v598
    %v703 = vpack.c.b16 %v607, %v603
    %v704 = vpack.c.b16 %v608, %v604
    %v705 = vpack.c.b16 %v609, %v605
    %v706 = vpack.c.b16 %v610, %v606
    %v707 = vpack.c.b16 %v615, %v611
    %v708 = vpack.c.b16 %v616, %v612
    %v709 = vpack.c.b16 %v617, %v613
    %v710 = vpack.c.b16 %v618, %v614
    %v711 = vpack.c.b16 %v623, %v619
    %v712 = vpack.c.b16 %v624, %v620
    %v713 = vpack.c.b16 %v625, %v621
    %v714 = vpack.c.b16 %v626, %v622
    %v715 = vpack.c.b16 %v631, %v627
    %v716 = vpack.c.b16 %v632, %v628
    %v717 = vpack.c.b16 %v633, %v629
    %v718 = vpack.c.b16 %v634, %v630
    %v719 = vpack.c.b16 %v639, %v635
    %v720 = vpack.c.b16 %v640, %v636
    %v721 = vpack.c.b16 %v641, %v637
    %v722 = vpack.c.b16 %v642, %v638
    %v723 = vpack.c.b16 %v647, %v643
    %v724 = vpack.c.b16 %v648, %v644
    %v725 = vpack.c.b16 %v649, %v645
    %v726 = vpack.c.b16 %v650, %v646
    %v727 = vpack.c.b16 %v655, %v651
    %v728 = vpack.c.b16 %v656, %v652
    %v729 = vpack.c.b16 %v657, %v653
    %v730 = vpack.c.b16 %v658, %v654
    %v731 = vpack.c.b16 %v663, %v659
    %v732 = vpack.c.b16 %v664, %v660
    %v733 = vpack.c.b16 %v665, %v661
    %v734 = vpack.c.b16 %v666, %v662
    %v735 = vpack.c.b16 %v671, %v667
    %v736 = vpack.c.b16 %v672, %v668
    %v737 = vpack.c.b16 %v673, %v669
    %v738 = vpack.c.b16 %v674, %v670
    %803 = vmatprep.subr.bf16.mxu0 %v704
    %804 = vmatpush1.bf16.msra.mxu0 %v703
    %805 = vmatprep.subr.bf16.mxu0 %v700
    %806 = vmatpush1.bf16.msra.mxu0 %v699
    %807 = vmatprep.subr.bf16.mxu0 %v696
    %808 = vmatpush1.bf16.msra.mxu0 %v695
    %809 = vmatprep.subr.bf16.mxu0 %v692
    %810 = vmatpush1.bf16.msra.mxu0 %v691
    %811 = vmatprep.subr.bf16.mxu0 %v688
    %812 = vmatpush1.bf16.msra.mxu0 %v687
    %813 = vmatprep.subr.bf16.mxu0 %v684
    %814 = vmatpush1.bf16.msra.mxu0 %v683
    %815 = vmatprep.subr.bf16.mxu0 %v680
    %816 = vmatpush1.bf16.msra.mxu0 %v679
    %817 = vmatprep.subr.bf16.mxu0 %v676
    %818 = vmatpush1.bf16.msra.mxu0 %v675
    %819 = vmatprep.subr.bf16.mxu0 %v736
    %820 = vmatpush2.bf16.msra.mxu0 %v735
    %821 = vmatprep.subr.bf16.mxu0 %v732
    %822 = vmatpush2.bf16.msra.mxu0 %v731
    %823 = vmatprep.subr.bf16.mxu0 %v728
    %824 = vmatpush2.bf16.msra.mxu0 %v727
    %825 = vmatprep.subr.bf16.mxu0 %v724
    %826 = vmatpush2.bf16.msra.mxu0 %v723
    %827 = vmatprep.subr.bf16.mxu0 %v720
    %828 = vmatpush2.bf16.msra.mxu0 %v719
    %829 = vmatprep.subr.bf16.mxu0 %v716
    %830 = vmatpush2.bf16.msra.mxu0 %v715
    %831 = vmatprep.subr.bf16.mxu0 %v712
    %832 = vmatpush2.bf16.msra.mxu0 %v711
    %833 = vmatprep.subr.bf16.mxu0 %v708
    %834 = vmatpush2.bf16.msra.mxu0 %v707
    %835 = vmatprep.mubr.bf16.mxu0 %v397
    %836 = vmatmul.mubr.bf16.gmra.mxu0 %v396
    %v837 = vpop.f32.mrf.mxu0
    %v838 = vadd.f32 %v466, %v837
    %v839 = vpop.f32.mrf.mxu0
    %v840 = vadd.f32 %v470, %v839
    %v841 = vpop.f32.mrf.mxu0
    %v842 = vpop.f32.mrf.mxu0
    %843 = vdwg.mxu0
    %844 = vmatprep.subr.bf16.mxu0 %v706
    %845 = vmatpush1.bf16.msra.mxu0 %v705
    %846 = vmatprep.subr.bf16.mxu0 %v702
    %847 = vmatpush1.bf16.msra.mxu0 %v701
    %848 = vmatprep.subr.bf16.mxu0 %v698
    %849 = vmatpush1.bf16.msra.mxu0 %v697
    %850 = vmatprep.subr.bf16.mxu0 %v694
    %851 = vmatpush1.bf16.msra.mxu0 %v693
    %852 = vmatprep.subr.bf16.mxu0 %v690
    %853 = vmatpush1.bf16.msra.mxu0 %v689
    %854 = vmatprep.subr.bf16.mxu0 %v686
    %855 = vmatpush1.bf16.msra.mxu0 %v685
    %856 = vmatprep.subr.bf16.mxu0 %v682
    %857 = vmatpush1.bf16.msra.mxu0 %v681
    %858 = vmatprep.subr.bf16.mxu0 %v678
    %859 = vmatpush1.bf16.msra.mxu0 %v677
    %860 = vmatprep.subr.bf16.mxu0 %v738
    %861 = vmatpush2.bf16.msra.mxu0 %v737
    %862 = vmatprep.subr.bf16.mxu0 %v734
    %863 = vmatpush2.bf16.msra.mxu0 %v733
    %864 = vmatprep.subr.bf16.mxu0 %v730
    %865 = vmatpush2.bf16.msra.mxu0 %v729
    %866 = vmatprep.subr.bf16.mxu0 %v726
    %867 = vmatpush2.bf16.msra.mxu0 %v725
    %868 = vmatprep.subr.bf16.mxu0 %v722
    %869 = vmatpush2.bf16.msra.mxu0 %v721
    %870 = vmatprep.subr.bf16.mxu0 %v718
    %871 = vmatpush2.bf16.msra.mxu0 %v717
    %872 = vmatprep.subr.bf16.mxu0 %v714
    %873 = vmatpush2.bf16.msra.mxu0 %v713
    %874 = vmatprep.subr.bf16.mxu0 %v710
    %875 = vmatpush2.bf16.msra.mxu0 %v709
    %876 = vmatprep.mubr.bf16.mxu0 %v397
    %877 = vmatmul.mubr.bf16.gmra.mxu0 %v396
    %v878 = vpop.f32.mrf.mxu0
    %v879 = vadd.f32 %v474, %v878
    %v880 = vpop.f32.mrf.mxu0
    %v881 = vadd.f32 %v478, %v880
    %v882 = vpop.f32.mrf.mxu0
    %v883 = vpop.f32.mrf.mxu0
    %884 = vdwg.mxu0
    %vm885 = vcmp.ge.f32.partialorder %v838, 0.0
    %vm886 = vcmp.ge.f32.partialorder %v840, 0.0
    %vm887 = vcmp.ge.f32.partialorder %v879, 0.0
    %vm888 = vcmp.ge.f32.partialorder %v881, 0.0
    %v889 = vmul.f32 %v838, 0.1
    %v890 = vmul.f32 %v840, 0.1
    %v891 = vmul.f32 %v879, 0.1
    %v892 = vmul.f32 %v881, 0.1
    %v893 = vsel %vm885, %v838, %v889
    %v894 = vsel %vm886, %v840, %v890
    %v895 = vsel %vm887, %v879, %v891
    %v896 = vsel %vm888, %v881, %v892
    %v897 = vpack.c.bf16 %v893, %v893
    %v898 = vpack.c.bf16 %v894, %v894
    %v899 = vpack.c.bf16 %v895, %v895
    %v900 = vpack.c.bf16 %v896, %v896
    %v901 = vld [vmem:[#allocation7] sm:$0xf]
    %v902 = vld [vmem:[#allocation7 + $0x4] sm:$0xf]
    %v903 = vld [vmem:[#allocation7 + $0x8] sm:$0xf]
    %v904 = vld [vmem:[#allocation7 + $0xc] sm:$0xf]
    %v905 = vld [vmem:[#allocation7 + $0x10] sm:$0xf]
    %v906 = vld [vmem:[#allocation7 + $0x14] sm:$0xf]
    %v907 = vld [vmem:[#allocation7 + $0x18] sm:$0xf]
    %v908 = vld [vmem:[#allocation7 + $0x1c] sm:$0xf]
    %v909 = vld [vmem:[#allocation7 + $0x20] sm:$0xf]
    %v910 = vld [vmem:[#allocation7 + $0x24] sm:$0xf]
    %v911 = vld [vmem:[#allocation7 + $0x28] sm:$0xf]
    %v912 = vld [vmem:[#allocation7 + $0x2c] sm:$0xf]
    %v913 = vld [vmem:[#allocation7 + $0x30] sm:$0xf]
    %v914 = vld [vmem:[#allocation7 + $0x34] sm:$0xf]
    %v915 = vld [vmem:[#allocation7 + $0x38] sm:$0xf]
    %v916 = vld [vmem:[#allocation7 + $0x3c] sm:$0xf]
    %v917 = vld [vmem:[#allocation7 + $0x40] sm:$0xf]
    %v918 = vld [vmem:[#allocation7 + $0x44] sm:$0xf]
    %v919 = vld [vmem:[#allocation7 + $0x48] sm:$0xf]
    %v920 = vld [vmem:[#allocation7 + $0x4c] sm:$0xf]
    %v921 = vld [vmem:[#allocation7 + $0x50] sm:$0xf]
    %v922 = vld [vmem:[#allocation7 + $0x54] sm:$0xf]
    %v923 = vld [vmem:[#allocation7 + $0x58] sm:$0xf]
    %v924 = vld [vmem:[#allocation7 + $0x5c] sm:$0xf]
    %v925 = vld [vmem:[#allocation7 + $0x60] sm:$0xf]
    %v926 = vld [vmem:[#allocation7 + $0x64] sm:$0xf]
    %v927 = vld [vmem:[#allocation7 + $0x68] sm:$0xf]
    %v928 = vld [vmem:[#allocation7 + $0x6c] sm:$0xf]
    %v929 = vld [vmem:[#allocation7 + $0x70] sm:$0xf]
    %v930 = vld [vmem:[#allocation7 + $0x74] sm:$0xf]
    %v931 = vld [vmem:[#allocation7 + $0x78] sm:$0xf]
    %v932 = vld [vmem:[#allocation7 + $0x7c] sm:$0xf]
    %v933 = vld [vmem:[#allocation7 + $0x80] sm:$0xf]
    %v934 = vld [vmem:[#allocation7 + $0x84] sm:$0xf]
    %v935 = vld [vmem:[#allocation7 + $0x88] sm:$0xf]
    %v936 = vld [vmem:[#allocation7 + $0x8c] sm:$0xf]
    %v937 = vld [vmem:[#allocation7 + $0x90] sm:$0xf]
    %v938 = vld [vmem:[#allocation7 + $0x94] sm:$0xf]
    %v939 = vld [vmem:[#allocation7 + $0x98] sm:$0xf]
    %v940 = vld [vmem:[#allocation7 + $0x9c] sm:$0xf]
    %v941 = vld [vmem:[#allocation7 + $0xa0] sm:$0xf]
    %v942 = vld [vmem:[#allocation7 + $0xa4] sm:$0xf]
    %v943 = vld [vmem:[#allocation7 + $0xa8] sm:$0xf]
    %v944 = vld [vmem:[#allocation7 + $0xac] sm:$0xf]
    %v945 = vld [vmem:[#allocation7 + $0xb0] sm:$0xf]
    %v946 = vld [vmem:[#allocation7 + $0xb4] sm:$0xf]
    %v947 = vld [vmem:[#allocation7 + $0xb8] sm:$0xf]
    %v948 = vld [vmem:[#allocation7 + $0xbc] sm:$0xf]
    %v949 = vld [vmem:[#allocation7 + $0xc0] sm:$0xf]
    %v950 = vld [vmem:[#allocation7 + $0xc4] sm:$0xf]
    %v951 = vld [vmem:[#allocation7 + $0xc8] sm:$0xf]
    %v952 = vld [vmem:[#allocation7 + $0xcc] sm:$0xf]
    %v953 = vld [vmem:[#allocation7 + $0xd0] sm:$0xf]
    %v954 = vld [vmem:[#allocation7 + $0xd4] sm:$0xf]
    %v955 = vld [vmem:[#allocation7 + $0xd8] sm:$0xf]
    %v956 = vld [vmem:[#allocation7 + $0xdc] sm:$0xf]
    %v957 = vld [vmem:[#allocation7 + $0xe0] sm:$0xf]
    %v958 = vld [vmem:[#allocation7 + $0xe4] sm:$0xf]
    %v959 = vld [vmem:[#allocation7 + $0xe8] sm:$0xf]
    %v960 = vld [vmem:[#allocation7 + $0xec] sm:$0xf]
    %v961 = vld [vmem:[#allocation7 + $0xf0] sm:$0xf]
    %v962 = vld [vmem:[#allocation7 + $0xf4] sm:$0xf]
    %v963 = vld [vmem:[#allocation7 + $0xf8] sm:$0xf]
    %v964 = vld [vmem:[#allocation7 + $0xfc] sm:$0xf]
    %v966 = vlaneseq
    %v967 = vshrl.u32 %v966, 7
    %v968 = vsub.s32 0, %v967
    %v969 = vrot.slane %v100, %v968
    %v1035 = vunpack.c.l.b16 %v901
    %v1036 = vunpack.c.l.b16 %v902
    %v1037 = vunpack.c.l.b16 %v903
    %v1038 = vunpack.c.l.b16 %v904
    %v1039 = vunpack.c.l.b16 %v905
    %v1040 = vunpack.c.l.b16 %v906
    %v1041 = vunpack.c.l.b16 %v907
    %v1042 = vunpack.c.l.b16 %v908
    %v1043 = vunpack.c.l.b16 %v909
    %v1044 = vunpack.c.l.b16 %v910
    %v1045 = vunpack.c.l.b16 %v911
    %v1046 = vunpack.c.l.b16 %v912
    %v1047 = vunpack.c.l.b16 %v913
    %v1048 = vunpack.c.l.b16 %v914
    %v1049 = vunpack.c.l.b16 %v915
    %v1050 = vunpack.c.l.b16 %v916
    %v1051 = vunpack.c.l.b16 %v917
    %v1052 = vunpack.c.l.b16 %v918
    %v1053 = vunpack.c.l.b16 %v919
    %v1054 = vunpack.c.l.b16 %v920
    %v1055 = vunpack.c.l.b16 %v921
    %v1056 = vunpack.c.l.b16 %v922
    %v1057 = vunpack.c.l.b16 %v923
    %v1058 = vunpack.c.l.b16 %v924
    %v1059 = vunpack.c.l.b16 %v925
    %v1060 = vunpack.c.l.b16 %v926
    %v1061 = vunpack.c.l.b16 %v927
    %v1062 = vunpack.c.l.b16 %v928
    %v1063 = vunpack.c.l.b16 %v929
    %v1064 = vunpack.c.l.b16 %v930
    %v1065 = vunpack.c.l.b16 %v931
    %v1066 = vunpack.c.l.b16 %v932
    %v1067 = vunpack.c.l.b16 %v933
    %v1068 = vunpack.c.l.b16 %v934
    %v1069 = vunpack.c.l.b16 %v935
    %v1070 = vunpack.c.l.b16 %v936
    %v1071 = vunpack.c.l.b16 %v937
    %v1072 = vunpack.c.l.b16 %v938
    %v1073 = vunpack.c.l.b16 %v939
    %v1074 = vunpack.c.l.b16 %v940
    %v1075 = vunpack.c.l.b16 %v941
    %v1076 = vunpack.c.l.b16 %v942
    %v1077 = vunpack.c.l.b16 %v943
    %v1078 = vunpack.c.l.b16 %v944
    %v1079 = vunpack.c.l.b16 %v945
    %v1080 = vunpack.c.l.b16 %v946
    %v1081 = vunpack.c.l.b16 %v947
    %v1082 = vunpack.c.l.b16 %v948
    %v1083 = vunpack.c.l.b16 %v949
    %v1084 = vunpack.c.l.b16 %v950
    %v1085 = vunpack.c.l.b16 %v951
    %v1086 = vunpack.c.l.b16 %v952
    %v1087 = vunpack.c.l.b16 %v953
    %v1088 = vunpack.c.l.b16 %v954
    %v1089 = vunpack.c.l.b16 %v955
    %v1090 = vunpack.c.l.b16 %v956
    %v1091 = vunpack.c.l.b16 %v957
    %v1092 = vunpack.c.l.b16 %v958
    %v1093 = vunpack.c.l.b16 %v959
    %v1094 = vunpack.c.l.b16 %v960
    %v1095 = vunpack.c.l.b16 %v961
    %v1096 = vunpack.c.l.b16 %v962
    %v1097 = vunpack.c.l.b16 %v963
    %v1098 = vunpack.c.l.b16 %v964
    %v1099 = vpack.c.b16 %v1036, %v1035
    %v1100 = vpack.c.b16 %v1038, %v1037
    %v1101 = vpack.c.b16 %v1040, %v1039
    %v1102 = vpack.c.b16 %v1042, %v1041
    %v1103 = vpack.c.b16 %v1044, %v1043
    %v1104 = vpack.c.b16 %v1046, %v1045
    %v1105 = vpack.c.b16 %v1048, %v1047
    %v1106 = vpack.c.b16 %v1050, %v1049
    %v1107 = vpack.c.b16 %v1052, %v1051
    %v1108 = vpack.c.b16 %v1054, %v1053
    %v1109 = vpack.c.b16 %v1056, %v1055
    %v1110 = vpack.c.b16 %v1058, %v1057
    %v1111 = vpack.c.b16 %v1060, %v1059
    %v1112 = vpack.c.b16 %v1062, %v1061
    %v1113 = vpack.c.b16 %v1064, %v1063
    %v1114 = vpack.c.b16 %v1066, %v1065
    %v1115 = vpack.c.b16 %v1068, %v1067
    %v1116 = vpack.c.b16 %v1070, %v1069
    %v1117 = vpack.c.b16 %v1072, %v1071
    %v1118 = vpack.c.b16 %v1074, %v1073
    %v1119 = vpack.c.b16 %v1076, %v1075
    %v1120 = vpack.c.b16 %v1078, %v1077
    %v1121 = vpack.c.b16 %v1080, %v1079
    %v1122 = vpack.c.b16 %v1082, %v1081
    %v1123 = vpack.c.b16 %v1084, %v1083
    %v1124 = vpack.c.b16 %v1086, %v1085
    %v1125 = vpack.c.b16 %v1088, %v1087
    %v1126 = vpack.c.b16 %v1090, %v1089
    %v1127 = vpack.c.b16 %v1092, %v1091
    %v1128 = vpack.c.b16 %v1094, %v1093
    %v1129 = vpack.c.b16 %v1096, %v1095
    %v1130 = vpack.c.b16 %v1098, %v1097
    %1163 = vmatprep.subr.bf16.mxu0 0
    %1164 = vmatpush1.bf16.msra.mxu0 %v1106
    %1165 = vmatprep.subr.bf16.mxu0 0
    %1166 = vmatpush1.bf16.msra.mxu0 %v1105
    %1167 = vmatprep.subr.bf16.mxu0 0
    %1168 = vmatpush1.bf16.msra.mxu0 %v1104
    %1169 = vmatprep.subr.bf16.mxu0 0
    %1170 = vmatpush1.bf16.msra.mxu0 %v1103
    %1171 = vmatprep.subr.bf16.mxu0 0
    %1172 = vmatpush1.bf16.msra.mxu0 %v1102
    %1173 = vmatprep.subr.bf16.mxu0 0
    %1174 = vmatpush1.bf16.msra.mxu0 %v1101
    %1175 = vmatprep.subr.bf16.mxu0 0
    %1176 = vmatpush1.bf16.msra.mxu0 %v1100
    %1177 = vmatprep.subr.bf16.mxu0 0
    %1178 = vmatpush1.bf16.msra.mxu0 %v1099
    %1179 = vmatprep.subr.bf16.mxu0 0
    %1180 = vmatpush2.bf16.msra.mxu0 %v1114
    %1181 = vmatprep.subr.bf16.mxu0 0
    %1182 = vmatpush2.bf16.msra.mxu0 %v1113
    %1183 = vmatprep.subr.bf16.mxu0 0
    %1184 = vmatpush2.bf16.msra.mxu0 %v1112
    %1185 = vmatprep.subr.bf16.mxu0 0
    %1186 = vmatpush2.bf16.msra.mxu0 %v1111
    %1187 = vmatprep.subr.bf16.mxu0 0
    %1188 = vmatpush2.bf16.msra.mxu0 %v1110
    %1189 = vmatprep.subr.bf16.mxu0 0
    %1190 = vmatpush2.bf16.msra.mxu0 %v1109
    %1191 = vmatprep.subr.bf16.mxu0 0
    %1192 = vmatpush2.bf16.msra.mxu0 %v1108
    %1193 = vmatprep.subr.bf16.mxu0 0
    %1194 = vmatpush2.bf16.msra.mxu0 %v1107
    %1195 = vmatprep.mubr.bf16.mxu0 %v898
    %1196 = vmatmul.mubr.bf16.gmra.mxu0 %v897
    %v1197 = vpop.f32.mrf.mxu0
    %v1198 = vadd.f32 %v969, %v1197
    %v1199 = vpop.f32.mrf.mxu0
    %v1200 = vpop.f32.mrf.mxu0
    %v1201 = vpop.f32.mrf.mxu0
    %1202 = vdwg.mxu0
    %1203 = vmatprep.subr.bf16.mxu0 0
    %1204 = vmatpush1.bf16.msra.mxu0 %v1122
    %1205 = vmatprep.subr.bf16.mxu0 0
    %1206 = vmatpush1.bf16.msra.mxu0 %v1121
    %1207 = vmatprep.subr.bf16.mxu0 0
    %1208 = vmatpush1.bf16.msra.mxu0 %v1120
    %1209 = vmatprep.subr.bf16.mxu0 0
    %1210 = vmatpush1.bf16.msra.mxu0 %v1119
    %1211 = vmatprep.subr.bf16.mxu0 0
    %1212 = vmatpush1.bf16.msra.mxu0 %v1118
    %1213 = vmatprep.subr.bf16.mxu0 0
    %1214 = vmatpush1.bf16.msra.mxu0 %v1117
    %1215 = vmatprep.subr.bf16.mxu0 0
    %1216 = vmatpush1.bf16.msra.mxu0 %v1116
    %1217 = vmatprep.subr.bf16.mxu0 0
    %1218 = vmatpush1.bf16.msra.mxu0 %v1115
    %1219 = vmatprep.subr.bf16.mxu0 0
    %1220 = vmatpush2.bf16.msra.mxu0 %v1130
    %1221 = vmatprep.subr.bf16.mxu0 0
    %1222 = vmatpush2.bf16.msra.mxu0 %v1129
    %1223 = vmatprep.subr.bf16.mxu0 0
    %1224 = vmatpush2.bf16.msra.mxu0 %v1128
    %1225 = vmatprep.subr.bf16.mxu0 0
    %1226 = vmatpush2.bf16.msra.mxu0 %v1127
    %1227 = vmatprep.subr.bf16.mxu0 0
    %1228 = vmatpush2.bf16.msra.mxu0 %v1126
    %1229 = vmatprep.subr.bf16.mxu0 0
    %1230 = vmatpush2.bf16.msra.mxu0 %v1125
    %1231 = vmatprep.subr.bf16.mxu0 0
    %1232 = vmatpush2.bf16.msra.mxu0 %v1124
    %1233 = vmatprep.subr.bf16.mxu0 0
    %1234 = vmatpush2.bf16.msra.mxu0 %v1123
    %1235 = vmatprep.mubr.bf16.mxu0 %v900
    %1236 = vmatmul.mubr.bf16.gmra.mxu0 %v899
    %v1237 = vpop.f32.mrf.mxu0
    %v1238 = vadd.f32 %v1198, %v1237
    %v1239 = vpop.f32.mrf.mxu0
    %v1240 = vpop.f32.mrf.mxu0
    %v1241 = vpop.f32.mrf.mxu0
    %1242 = vdwg.mxu0
    %v1243 = vlaneseq
    %v1244 = vand.u32 %v1243, 127
    %vm1245 = vcmp.ge.s32.totalorder %v1244, 3
    %vm1246 = vcmp.lt.s32.totalorder %v1244, 7
    %vm1247 = vmand %vm1245, %vm1246
    %v1248 = vmul.f32 %v1238, %v1238
    %v1249 = vsel %vm1247, %v1248, 0.0
    %1250 = vadd.xlane.f32.xlu0 %v1249
    %v1251 = vpop.xlane.xlu0 %1250
    %v1252 = vmax.f32 %v1251, 1e-24
    %v1253 = vrsqrt.pop %v1252
    %v1254 = vmul.f32 %v1238, %v1253
    %v1255 = vsel %vm1247, %v1254, %v1238
    %1256 = vst [vmem:[%s6] sm:$0xff] %v1255
    %s1257 = scalar_lea.vmem %s0, 32
    %v1258 = vld [vmem:[%s1257] sm:$0xff]
    %v1259 = vsub.f32 %v1258, 0.5
    %v1260 = vsub.f32 %v1259, %v82
    %s1261 = scalar_lea.vmem %s0, 40
    %v1262 = vld [vmem:[%s1261] sm:$0xff]
    %v1263 = vsub.f32 %v1262, %v85
    %v1264 = vmul.f32 %v1260, %v1260
    %v1265 = vmul.f32 %v1263, %v1263
    %v1266 = vadd.f32 %v1264, %v1265
    %vm1267 = vcmp.lt.f32.partialorder %v1266, 0.00024414063
    %v1268 = vsel %vm1267, 1, 0
    %1269 = vst [vmem:[%s7] sm:$0xff] %v1268
    // Predicated region
    $region42: #{lccnet_head.1} parent=1 // pred_check
      _
    $region43: #{lccnet_head.1} parent=1 // pred_check_branch
      %1271 = sbr.rel (0) target = $region45
    $region44: #{lccnet_head.1} parent=1 // pred_region
      _
    $region45: #{lccnet_head.1} parent=1 // pred_fallthru
      _
    // Predicated region
    $region46: #{lccnet_head.1} parent=1 // pred_check
      _
    $region47: #{lccnet_head.1} parent=1 // pred_check_branch
      %1273 = sbr.rel (0) target = $region49
    $region48: #{lccnet_head.1} parent=1 // pred_region
      _
    $region49: #{lccnet_head.1} parent=1 // pred_fallthru
      _
    // Predicated region
    $region50: #{lccnet_head.1} parent=1 // pred_check
      _
    $region51: #{lccnet_head.1} parent=1 // pred_check_branch
      %1275 = sbr.rel (0) target = $region53
    $region52: #{lccnet_head.1} parent=1 // pred_region
      _
    $region53: #{lccnet_head.1} parent=1 // pred_fallthru
      _
    // Predicated region
    $region54: #{lccnet_head.1} parent=1 // pred_check
      _
    $region55: #{lccnet_head.1} parent=1 // pred_check_branch
      %1277 = sbr.rel (0) target = $region57
    $region56: #{lccnet_head.1} parent=1 // pred_region
      _
    $region57: #{lccnet_head.1} parent=1 // pred_fallthru
      _
    %1278 = vsyncpa [#allocation3], 1
    %1279 = vsyncpa [#allocation5], 1
    %1280 = vsyncpa [#allocation8], 1

</llo_original>
